<compile_context>
chip_gen: v6e
topology: v6e:2x2x1
jax: 0.10.0
libtpu: 0.0.40
codegen_flags: <defaults>
</compile_context>

<pallas_src>
import math

import jax
import jax.numpy as jnp
from jax.experimental import pallas as pl
from jax.experimental.pallas import tpu as pltpu


def _cdiv(a, b):
    return -(-a // b)


def _round_up(x, m):
    return _cdiv(x, m) * m


# --------------------------------------------------------------------------- #
# Kernel body
# --------------------------------------------------------------------------- #
def _make_adapter_kernel(add_residual, has_residual):
    """Kernel body factory.

    Refs (in order): x, W_down^T, b_down, W_up^T*scale, b_up*scale,
    [residual,] out.  When `has_residual` is False and `add_residual` is True
    the x tile itself is reused as the residual (saves one HBM stream).
    Matmuls run in the weight dtype (bf16 if the caller prepared bf16 weights)
    with f32 accumulation; the bias/ReLU/residual epilogue is VPU filler
    under the DMA bound.
    """

    def kernel(x_ref, wd_ref, bd_ref, wu_ref, bu_ref, *rest):
        if has_residual:
            res_ref, out_ref = rest
        else:
            (out_ref,) = rest
            res_ref = None

        x = x_ref[...]

        # Down projection + bias + ReLU (dropout p=0.0 -> identity).
        down = jnp.dot(x.astype(wd_ref.dtype), wd_ref[...],
                       preferred_element_type=jnp.float32)
        down = jnp.maximum(down + bd_ref[...], 0.0)

        # Up projection (adapter scale pre-folded into wu/bu by the wrapper).
        up = jnp.dot(down.astype(wu_ref.dtype), wu_ref[...],
                     preferred_element_type=jnp.float32)
        up = up + bu_ref[...]

        if add_residual:
            res = x if res_ref is None else res_ref[...]
            up = up + res.astype(jnp.float32)

        out_ref[...] = up.astype(out_ref.dtype)

    return kernel


# --------------------------------------------------------------------------- #
# Tiling / VMEM budgeting
# --------------------------------------------------------------------------- #
def _vmem_budget_bytes():
    """Generation-aware VMEM budget: ~96 MiB on 128-MiB chips (v5e/v6e),
    ~40 MiB on 64-MiB chips (v7x); conservative fallback if the query fails."""
    try:
        cap = pltpu.get_tpu_info().vmem_capacity_bytes
    except Exception:  # pragma: no cover - hardware query unavailable
        cap = 64 * 1024 * 1024
    if cap >= 128 * 1024 * 1024:
        return 96 * 1024 * 1024
    return 40 * 1024 * 1024


def _derive_tile_m(n, d_model, bottleneck, act_itemsize, w_itemsize,
                   has_residual, budget):
    """Row-tile size from the VMEM budget.

    Accounts for double-buffered streamed tiles (x, out, [residual]), the f32
    `up`/`down` intermediates, and the resident weights (still double-buffered
    by the pipeline — their footprint is subtracted from the budget).  The
    tile is capped so the grid stays >= ~8 steps deep (v7x megacore sharding
    and prefetch/writeback overlap).
    """
    weight_bytes = 2 * ((2 * d_model * bottleneck) * w_itemsize
                        + (d_model + bottleneck) * 4)
    avail = max(budget - weight_bytes, 4 * 1024 * 1024)

    n_streams = 3 if has_residual else 2
    per_row = (n_streams * 2 * d_model * act_itemsize   # pipelined HBM streams
               + d_model * 4 + bottleneck * 4)          # f32 intermediates
    tm = (avail // per_row) // 8 * 8
    tm = min(tm, _round_up(_cdiv(n, 8), 8))             # keep grid depth >= ~8
    tm = min(tm, 32768)                                  # sanity cap
    tm = max(tm, 8)
    return tm


# --------------------------------------------------------------------------- #
# Wrappers
# --------------------------------------------------------------------------- #
def prepare_adapter_params(w_down, b_down, w_up, b_up, *, scale=0.1,
                           matmul_dtype=None):
    """One-time parameter prep — hoist/cache this outside the per-step path.

    Weights arrive in PyTorch nn.Linear convention:
      w_down [bottleneck, d_model], w_up [d_model, bottleneck].
    Output: transposed to (in, out), adapter scale folded into the up
    projection, weights cast to `matmul_dtype` (pass jnp.bfloat16 to feed the
    MXU bf16 operands), biases in f32.
    """
    dt = w_down.dtype if matmul_dtype is None else matmul_dtype
    wd_t = w_down.T.astype(dt)
    bd = b_down.astype(jnp.float32).reshape(1, -1)
    wu_t = (w_up.T.astype(jnp.float32) * scale).astype(dt)
    bu = (b_up.astype(jnp.float32) * scale).reshape(1, -1)
    return wd_t, bd, wu_t, bu


def adapter_apply(x, params, *, add_residual=True, residual=None):
    """Run the adapter on x: [..., d_model] with prepared params."""
    wd_t, bd, wu_t, bu = params
    orig_shape = x.shape
    d_model = orig_shape[-1]
    bottleneck = wd_t.shape[1]

    # No padding / slicing of the dominant NxD streams: blocks carry the full
    # feature dim and Pallas masks the ragged last row-tile.
    x2d = x.reshape(-1, d_model)
    n = x2d.shape[0]
    has_residual = residual is not None

    act_itemsize = jnp.dtype(x.dtype).itemsize
    w_itemsize = jnp.dtype(wd_t.dtype).itemsize
    budget = _vmem_budget_bytes()
    tm = _derive_tile_m(n, d_model, bottleneck, act_itemsize, w_itemsize,
                        has_residual, budget)
    grid_m = _cdiv(n, tm)

    row_spec = pl.BlockSpec((tm, d_model), lambda i: (i, 0))   # streamed tiles
    full_spec = lambda a: pl.BlockSpec(a.shape, lambda i: (0, 0))  # resident

    in_specs = [row_spec, full_spec(wd_t), full_spec(bd),
                full_spec(wu_t), full_spec(bu)]
    args = [x2d, wd_t, bd, wu_t, bu]
    if has_residual:
        in_specs.append(row_spec)
        args.append(residual.reshape(-1, d_model))

    n_streams = 3 if has_residual else 2
    cost = pl.CostEstimate(
        flops=4 * n * d_model * bottleneck,
        transcendentals=0,
        bytes_accessed=(n_streams * n * d_model * act_itemsize
                        + 2 * d_model * bottleneck * w_itemsize),
    )

    out = pl.pallas_call(
        _make_adapter_kernel(add_residual, has_residual),
        out_shape=jax.ShapeDtypeStruct((n, d_model), x.dtype),
        grid_spec=pltpu.PrefetchScalarGridSpec(
            num_scalar_prefetch=0,
            grid=(grid_m,),
            in_specs=in_specs,
            out_specs=row_spec,
        ),
        compiler_params=pltpu.CompilerParams(
            dimension_semantics=("parallel",),
            vmem_limit_bytes=budget,
        ),
        cost_estimate=cost,
    )(*args)
    return out.reshape(orig_shape)


def adapter_forward(x, w_down, b_down, w_up, b_up, *, scale=0.1,
                    add_residual=True, residual=None, matmul_dtype=None):
    """Convenience wrapper: prep + apply.  In a real model call
    `prepare_adapter_params` once at load time and reuse the result."""
    params = prepare_adapter_params(w_down, b_down, w_up, b_up, scale=scale,
                                    matmul_dtype=matmul_dtype)
    return adapter_apply(x, params, add_residual=add_residual,
                         residual=residual)


# --------------------------------------------------------------------------- #
# Pure-JAX reference
# --------------------------------------------------------------------------- #
def adapter_reference(x, w_down, b_down, w_up, b_up, *, scale=0.1,
                      add_residual=True, residual=None):
    residual = x if residual is None else residual
    xf = x.astype(jnp.float32)
    down = jnp.maximum(
        xf @ w_down.T.astype(jnp.float32) + b_down.astype(jnp.float32), 0.0)
    up = (down @ w_up.T.astype(jnp.float32) + b_up.astype(jnp.float32)) * scale
    out = up + residual.astype(jnp.float32) if add_residual else up
    return out.astype(x.dtype)


if __name__ == "__main__":
    # Small shapes consistent with the module: d_model=32, bottleneck=16,
    # batch=2, seq=8.
    d_model, bottleneck = 32, 16
    batch, seq = 2, 8

    key = jax.random.PRNGKey(0)
    kx, kwd, kbd, kwu, kbu, kr = jax.random.split(key, 6)

    x = jax.random.normal(kx, (batch, seq, d_model), dtype=jnp.float32)

    # Deterministic parameter init.  (The module's 'lora' init zeroes W_up /
    # biases; nonzero values are used so the matmul path is actually tested.)
    bound_d = 1.0 / math.sqrt(d_model)
    bound_u = 1.0 / math.sqrt(bottleneck)
    w_down = jax.random.uniform(kwd, (bottleneck, d_model), jnp.float32, -bound_d, bound_d)
    b_down = jax.random.uniform(kbd, (bottleneck,), jnp.float32, -bound_d, bound_d)
    w_up = jax.random.uniform(kwu, (d_model, bottleneck), jnp.float32, -bound_u, bound_u)
    b_up = jax.random.uniform(kbu, (d_model,), jnp.float32, -bound_u, bound_u)

    # Case 1: default (residual == x, add_residual=True).
    out = jax.block_until_ready(
        adapter_forward(x, w_down, b_down, w_up, b_up, scale=0.1))
    ref = adapter_reference(x, w_down, b_down, w_up, b_up, scale=0.1)
    assert out.shape == x.shape
    assert jnp.allclose(out, ref, atol=1e-5, rtol=1e-5), "mismatch (residual=x)"

    # Case 2: add_residual=False (handled in-kernel).
    out2 = jax.block_until_ready(
        adapter_forward(x, w_down, b_down, w_up, b_up, scale=0.1,
                        add_residual=False))
    ref2 = adapter_reference(x, w_down, b_down, w_up, b_up, scale=0.1,
                             add_residual=False)
    assert jnp.allclose(out2, ref2, atol=1e-5, rtol=1e-5), "mismatch (no residual)"

    # Case 3: explicit distinct residual tensor (extra streamed input).
    res = jax.random.normal(kr, (batch, seq, d_model), dtype=jnp.float32)
    out3 = jax.block_until_ready(
        adapter_forward(x, w_down, b_down, w_up, b_up, scale=0.1, residual=res))
    ref3 = adapter_reference(x, w_down, b_down, w_up, b_up, scale=0.1,
                             residual=res)
    assert jnp.allclose(out3, ref3, atol=1e-5, rtol=1e-5), "mismatch (explicit residual)"

    # Case 4: bf16 activations end-to-end + bf16 MXU operands (f32 accumulate).
    x_bf = x.astype(jnp.bfloat16)
    out4 = jax.block_until_ready(
        adapter_forward(x_bf, w_down, b_down, w_up, b_up, scale=0.1,
                        matmul_dtype=jnp.bfloat16))
    ref4 = adapter_reference(x_bf, w_down.astype(jnp.bfloat16),
                             b_down, w_up.astype(jnp.bfloat16), b_up, scale=0.1)
    assert out4.dtype == jnp.bfloat16
    assert jnp.allclose(out4.astype(jnp.float32), ref4.astype(jnp.float32),
                        atol=5e-2, rtol=5e-2), "mismatch (bf16)"

    print("KERNEL_OK")
</pallas_src>

<mosaic_0001>
module attributes {stable_mosaic.version = 11 : i64} {
  func.func @kernel(%arg0: i32, %arg1: memref<8x32xf32, #tpu.memory_space<vmem>>, %arg2: memref<32x16xf32, #tpu.memory_space<vmem>>, %arg3: memref<1x16xf32, #tpu.memory_space<vmem>>, %arg4: memref<16x32xf32, #tpu.memory_space<vmem>>, %arg5: memref<1x32xf32, #tpu.memory_space<vmem>>, %arg6: memref<8x32xf32, #tpu.memory_space<vmem>>) attributes {dimension_semantics = [#tpu.dimension_semantics<parallel>], iteration_bounds = array<i64: 2>, scalar_prefetch = 0 : i64, scratch_operands = 0 : i64, tpu.core_type = #tpu.core_type<tc>, window_params = [{transform_indices = @transform_0, window_bounds = array<i64: 8, 32>}, {pipeline_mode = #tpu.pipeline_mode<synchronous>, transform_indices = @transform_1, window_bounds = array<i64: 32, 16>}, {pipeline_mode = #tpu.pipeline_mode<synchronous>, transform_indices = @transform_2, window_bounds = array<i64: 1, 16>}, {pipeline_mode = #tpu.pipeline_mode<synchronous>, transform_indices = @transform_3, window_bounds = array<i64: 16, 32>}, {pipeline_mode = #tpu.pipeline_mode<synchronous>, transform_indices = @transform_4, window_bounds = array<i64: 1, 32>}, {transform_indices = @transform_5, window_bounds = array<i64: 8, 32>}]} {
    %c0 = arith.constant 0 : index
    %c0_0 = arith.constant 0 : index
    %0 = vector.load %arg1[%c0, %c0_0] : memref<8x32xf32, #tpu.memory_space<vmem>>, vector<8x32xf32>
    %c0_1 = arith.constant 0 : index
    %c0_2 = arith.constant 0 : index
    %1 = vector.load %arg2[%c0_1, %c0_2] : memref<32x16xf32, #tpu.memory_space<vmem>>, vector<32x16xf32>
    %cst = arith.constant dense<0.000000e+00> : vector<8x16xf32>
    %2 = tpu.matmul %0, %1, %cst {dimension_numbers = #tpu.dot_dimension_numbers<[1], [0], [0], [1], [0, 0, 1, 1], [], []>} : vector<8x32xf32>, vector<32x16xf32>, vector<8x16xf32> -> vector<8x16xf32>
    %c0_3 = arith.constant 0 : index
    %c0_4 = arith.constant 0 : index
    %3 = vector.load %arg3[%c0_3, %c0_4] : memref<1x16xf32, #tpu.memory_space<vmem>>, vector<1x16xf32>
    %4 = vector.broadcast %3 : vector<1x16xf32> to vector<8x16xf32>
    %5 = arith.addf %2, %4 : vector<8x16xf32>
    %cst_5 = arith.constant 0.000000e+00 : f32
    %6 = vector.broadcast %cst_5 : f32 to vector<8x16xf32>
    %7 = arith.maximumf %5, %6 : vector<8x16xf32>
    %c0_6 = arith.constant 0 : index
    %c0_7 = arith.constant 0 : index
    %8 = vector.load %arg4[%c0_6, %c0_7] : memref<16x32xf32, #tpu.memory_space<vmem>>, vector<16x32xf32>
    %cst_8 = arith.constant dense<0.000000e+00> : vector<8x32xf32>
    %9 = tpu.matmul %7, %8, %cst_8 {dimension_numbers = #tpu.dot_dimension_numbers<[1], [0], [0], [1], [0, 0, 1, 1], [], []>} : vector<8x16xf32>, vector<16x32xf32>, vector<8x32xf32> -> vector<8x32xf32>
    %c0_9 = arith.constant 0 : index
    %c0_10 = arith.constant 0 : index
    %10 = vector.load %arg5[%c0_9, %c0_10] : memref<1x32xf32, #tpu.memory_space<vmem>>, vector<1x32xf32>
    %11 = vector.broadcast %10 : vector<1x32xf32> to vector<8x32xf32>
    %12 = arith.addf %9, %11 : vector<8x32xf32>
    %13 = arith.addf %12, %0 : vector<8x32xf32>
    %c0_11 = arith.constant 0 : index
    %c0_12 = arith.constant 0 : index
    %14 = vector.load %arg6[%c0_11, %c0_12] : memref<8x32xf32, #tpu.memory_space<vmem>>, vector<8x32xf32>
    tpu.vector_store %arg6[%c0_11, %c0_12], %13 {strides = array<i32>} : memref<8x32xf32, #tpu.memory_space<vmem>>, vector<8x32xf32>,
    return
  }
  func.func @transform_0(%arg0: i32) -> (i32, i32) {
    %c0_i32 = arith.constant 0 : i32
    %c0_i32_0 = arith.constant 0 : i32
    return %arg0, %c0_i32 : i32, i32
  }
  func.func @transform_1(%arg0: i32) -> (i32, i32) {
    %c0_i32 = arith.constant 0 : i32
    %c0_i32_0 = arith.constant 0 : i32
    %c0_i32_1 = arith.constant 0 : i32
    return %c0_i32, %c0_i32_0 : i32, i32
  }
  func.func @transform_2(%arg0: i32) -> (i32, i32) {
    %c0_i32 = arith.constant 0 : i32
    %c0_i32_0 = arith.constant 0 : i32
    %c0_i32_1 = arith.constant 0 : i32
    return %c0_i32, %c0_i32_0 : i32, i32
  }
  func.func @transform_3(%arg0: i32) -> (i32, i32) {
    %c0_i32 = arith.constant 0 : i32
    %c0_i32_0 = arith.constant 0 : i32
    %c0_i32_1 = arith.constant 0 : i32
    return %c0_i32, %c0_i32_0 : i32, i32
  }
  func.func @transform_4(%arg0: i32) -> (i32, i32) {
    %c0_i32 = arith.constant 0 : i32
    %c0_i32_0 = arith.constant 0 : i32
    %c0_i32_1 = arith.constant 0 : i32
    return %c0_i32, %c0_i32_0 : i32, i32
  }
  func.func @transform_5(%arg0: i32) -> (i32, i32) {
    %c0_i32 = arith.constant 0 : i32
    %c0_i32_0 = arith.constant 0 : i32
    return %arg0, %c0_i32 : i32, i32
  }
}

</mosaic_0001>

<llo_original>
// kernel: tpu_custom_call.1
$region0: #{tpu_custom_call.1}
  #allocation0 [shape = 'u32[]', space=smem, size = 0x4, offset = 0x4, fixed_abs, tag = 'smem constant byte address 0x4 - core index']
  #allocation1 [shape = 'u32[144,128]{1,0:T(1,128)}', space=vmem, size = 0x12000, scoped, tag = 'internal scratch']
  %s0 = inlined_call_operand.vmem [shape: f32[16,32], index: 0, kind: input, shape index: {}]
  %s1 = inlined_call_operand.vmem [shape: f32[32,16], index: 1, kind: input, shape index: {}]
  %s2 = inlined_call_operand.vmem [shape: f32[1,16], index: 2, kind: input, shape index: {}]
  %s3 = inlined_call_operand.vmem [shape: f32[16,32], index: 3, kind: input, shape index: {}]
  %s4 = inlined_call_operand.vmem [shape: f32[1,32], index: 4, kind: input, shape index: {}]
  %s5 = inlined_call_operand.hbm [shape: f32[16,32], index: 5, kind: output, shape index: {}]
  %s6 = sld [smem:[#allocation0]]
  $region53: #{tpu_custom_call.1} parent=0
    _
  %s8 = ssub.s32 1, %s6
  %s9 = scalar_select 0, %s8, %s6
  $region1: #{tpu_custom_call.1} parent=0
    #allocation2 [shape = 'u8[8192]{0}', space=vmem, size = 0x2000, scoped, tag = 'output window, operand 0']
    #allocation3 [shape = 's32[2]{0}', space=sflag, size = 0x8, scoped, tag = 'scoped memory for tpu_custom_call.1']
    %10 = vsyncpa [#allocation3], 0
    %s11 = scalar_lea.sflag [#allocation3], 1
    %12 = vsyncpa %s11, 0
    loop: start=0, step=1, limit=4
    $region2: #{tpu_custom_call.1} parent=1 // loop_pre_header
      _
    $region3: #{tpu_custom_call.1} parent=1 // loop_header
      %s14 = sphi 0, %s18
      %p15 = scmp.ge.s32.totalorder %s14, 4
      %s24 = sphi 0, %s26
      %s27 = sphi 0, %s24
      %s28 = sphi 0, %s27
      %s44 = sphi 0, %s28
      %s48 = sphi 0, %s48
      %s50 = sphi 0, %s48
      %s51 = sphi 0, %s50
      %s65 = sphi 0, %s51
      %s69 = sphi 0, %s69
      %s71 = sphi 0, %s69
      %s72 = sphi 0, %s71
      %s86 = sphi 0, %s72
      %s90 = sphi 0, %s90
      %s92 = sphi 0, %s90
      %s93 = sphi 0, %s92
      %s107 = sphi 0, %s93
      %s111 = sphi 0, %s111
      %s113 = sphi 0, %s111
      %s114 = sphi 0, %s113
      %s128 = sphi 0, %s114
      %s134 = sphi 0, %s136
      %s137 = sphi 0, %s134
      %s138 = sphi 0, %s137
      %s154 = sphi 0, %s138
    $region4: #{tpu_custom_call.1} parent=1 // loop_header_branch
      %17 = sbr.rel (%p15) target = $region8
    $region5: #{tpu_custom_call.1} parent=1 // loop_body
      %s19 = ssub.s32 %s14, 1
      %s20 = ssub.s32 %s14, 2
      %s21 = sadd.s32 %s14, 1
      %s22 = ssub.s32 %s14, %s21
      %p23 = scmp.eq.s32.totalorder %s22, 0
      %s25 = sadd.s32 %s24, 1
      %s26 = scalar_select %p23, %s24, %s25
      %p29 = pneg %p23
      %p30 = scmp.eq.s32.totalorder %s14, 1
      %p31 = por %p29, %p30
      %p32 = scmp.ne.s32.totalorder %s24, %s27
      %p33 = scmp.eq.s32.totalorder %s14, 0
      %p34 = por %p32, %p33
      %p35 = scmp.ne.s32.totalorder %s24, %s27
      %p36 = scmp.eq.s32.totalorder %s19, 1
      %p37 = por %p35, %p36
      %p38 = scmp.ne.s32.totalorder %s27, %s28
      %p39 = scmp.eq.s32.totalorder %s19, 0
      %p40 = por %p38, %p39
      %p41 = scmp.ne.s32.totalorder %s27, %s28
      %p42 = scmp.eq.s32.totalorder %s20, 1
      %p43 = por %p41, %p42
      %p45 = scmp.ne.s32.totalorder %s28, %s44
      %p46 = scmp.eq.s32.totalorder %s20, 0
      %p47 = por %p45, %p46
      %s49 = sadd.s32 %s48, 1
      %p52 = scmp.eq.s32.totalorder %s14, 1
      %p53 = scmp.ne.s32.totalorder %s48, %s50
      %p54 = scmp.eq.s32.totalorder %s14, 0
      %p55 = por %p53, %p54
      %p56 = scmp.ne.s32.totalorder %s48, %s50
      %p57 = scmp.eq.s32.totalorder %s19, 1
      %p58 = por %p56, %p57
      %p59 = scmp.ne.s32.totalorder %s50, %s51
      %p60 = scmp.eq.s32.totalorder %s19, 0
      %p61 = por %p59, %p60
      %p62 = scmp.ne.s32.totalorder %s50, %s51
      %p63 = scmp.eq.s32.totalorder %s20, 1
      %p64 = por %p62, %p63
      %p66 = scmp.ne.s32.totalorder %s51, %s65
      %p67 = scmp.eq.s32.totalorder %s20, 0
      %p68 = por %p66, %p67
      %s70 = sadd.s32 %s69, 1
      %p73 = scmp.eq.s32.totalorder %s14, 1
      %p74 = scmp.ne.s32.totalorder %s69, %s71
      %p75 = scmp.eq.s32.totalorder %s14, 0
      %p76 = por %p74, %p75
      %p77 = scmp.ne.s32.totalorder %s69, %s71
      %p78 = scmp.eq.s32.totalorder %s19, 1
      %p79 = por %p77, %p78
      %p80 = scmp.ne.s32.totalorder %s71, %s72
      %p81 = scmp.eq.s32.totalorder %s19, 0
      %p82 = por %p80, %p81
      %p83 = scmp.ne.s32.totalorder %s71, %s72
      %p84 = scmp.eq.s32.totalorder %s20, 1
      %p85 = por %p83, %p84
      %p87 = scmp.ne.s32.totalorder %s72, %s86
      %p88 = scmp.eq.s32.totalorder %s20, 0
      %p89 = por %p87, %p88
      %s91 = sadd.s32 %s90, 1
      %p94 = scmp.eq.s32.totalorder %s14, 1
      %p95 = scmp.ne.s32.totalorder %s90, %s92
      %p96 = scmp.eq.s32.totalorder %s14, 0
      %p97 = por %p95, %p96
      %p98 = scmp.ne.s32.totalorder %s90, %s92
      %p99 = scmp.eq.s32.totalorder %s19, 1
      %p100 = por %p98, %p99
      %p101 = scmp.ne.s32.totalorder %s92, %s93
      %p102 = scmp.eq.s32.totalorder %s19, 0
      %p103 = por %p101, %p102
      %p104 = scmp.ne.s32.totalorder %s92, %s93
      %p105 = scmp.eq.s32.totalorder %s20, 1
      %p106 = por %p104, %p105
      %p108 = scmp.ne.s32.totalorder %s93, %s107
      %p109 = scmp.eq.s32.totalorder %s20, 0
      %p110 = por %p108, %p109
      %s112 = sadd.s32 %s111, 1
      %p115 = scmp.eq.s32.totalorder %s14, 1
      %p116 = scmp.ne.s32.totalorder %s111, %s113
      %p117 = scmp.eq.s32.totalorder %s14, 0
      %p118 = por %p116, %p117
      %p119 = scmp.ne.s32.totalorder %s111, %s113
      %p120 = scmp.eq.s32.totalorder %s19, 1
      %p121 = por %p119, %p120
      %p122 = scmp.ne.s32.totalorder %s113, %s114
      %p123 = scmp.eq.s32.totalorder %s19, 0
      %p124 = por %p122, %p123
      %p125 = scmp.ne.s32.totalorder %s113, %s114
      %p126 = scmp.eq.s32.totalorder %s20, 1
      %p127 = por %p125, %p126
      %p129 = scmp.ne.s32.totalorder %s114, %s128
      %p130 = scmp.eq.s32.totalorder %s20, 0
      %p131 = por %p129, %p130
      %s132 = ssub.s32 %s14, %s21
      %p133 = scmp.eq.s32.totalorder %s132, 0
      %s135 = sadd.s32 %s134, 1
      %s136 = scalar_select %p133, %s134, %s135
      %p139 = pneg %p133
      %p140 = scmp.eq.s32.totalorder %s14, 1
      %p141 = por %p139, %p140
      %p142 = scmp.ne.s32.totalorder %s134, %s137
      %p143 = scmp.eq.s32.totalorder %s14, 0
      %p144 = por %p142, %p143
      %p145 = scmp.ne.s32.totalorder %s134, %s137
      %p146 = scmp.eq.s32.totalorder %s19, 1
      %p147 = por %p145, %p146
      %p148 = scmp.ne.s32.totalorder %s137, %s138
      %p149 = scmp.eq.s32.totalorder %s19, 0
      %p150 = por %p148, %p149
      %p151 = scmp.ne.s32.totalorder %s137, %s138
      %p152 = scmp.eq.s32.totalorder %s20, 1
      %p153 = por %p151, %p152
      %p155 = scmp.ne.s32.totalorder %s138, %s154
      %p156 = scmp.eq.s32.totalorder %s20, 0
      %p157 = por %p155, %p156
      %p158 = scmp.le.s32.totalorder 1, %s14
      %p159 = scmp.lt.s32.totalorder %s14, 3
      %p160 = pnand %p158, %p159
      %p161 = pneg %p160
      // Predicated region
      $region9: #{tpu_custom_call.1} parent=5 // pred_check
        _
      $region10: #{tpu_custom_call.1} parent=5 // pred_check_branch
        %163 = sbr.rel (%p160) target = $region12
      $region11: #{tpu_custom_call.1} parent=5 // pred_region
        %s164 = ssub.s32 %s14, 1
        // Predicated region
        $region13: #{tpu_custom_call.1} parent=11 // pred_check
          %p165 = pneg %p61
        $region14: #{tpu_custom_call.1} parent=11 // pred_check_branch
          %167 = sbr.rel (%p165) target = $region16
        $region15: #{tpu_custom_call.1} parent=11 // pred_region
          _
        $region16: #{tpu_custom_call.1} parent=11 // pred_fallthru
          _
        // Predicated region
        $region17: #{tpu_custom_call.1} parent=11 // pred_check
          %p168 = pneg %p82
        $region18: #{tpu_custom_call.1} parent=11 // pred_check_branch
          %170 = sbr.rel (%p168) target = $region20
        $region19: #{tpu_custom_call.1} parent=11 // pred_region
          _
        $region20: #{tpu_custom_call.1} parent=11 // pred_fallthru
          _
        // Predicated region
        $region21: #{tpu_custom_call.1} parent=11 // pred_check
          %p171 = pneg %p103
        $region22: #{tpu_custom_call.1} parent=11 // pred_check_branch
          %173 = sbr.rel (%p171) target = $region24
        $region23: #{tpu_custom_call.1} parent=11 // pred_region
          _
        $region24: #{tpu_custom_call.1} parent=11 // pred_fallthru
          _
        // Predicated region
        $region25: #{tpu_custom_call.1} parent=11 // pred_check
          %p174 = pneg %p124
        $region26: #{tpu_custom_call.1} parent=11 // pred_check_branch
          %176 = sbr.rel (%p174) target = $region28
        $region27: #{tpu_custom_call.1} parent=11 // pred_region
          _
        $region28: #{tpu_custom_call.1} parent=11 // pred_fallthru
          _
      $region12: #{tpu_custom_call.1} parent=5 // pred_fallthru
        _
      %p177 = scmp.lt.s32.totalorder %s14, 2
      // Predicated region
      $region29: #{tpu_custom_call.1} parent=5 // pred_check
        %p178 = pneg %p177
      $region30: #{tpu_custom_call.1} parent=5 // pred_check_branch
        %180 = sbr.rel (%p178) target = $region32
      $region31: #{tpu_custom_call.1} parent=5 // pred_region
        // Predicated region
        $region33: #{tpu_custom_call.1} parent=31 // pred_check
          %p181 = pneg %p34
        $region34: #{tpu_custom_call.1} parent=31 // pred_check_branch
          %183 = sbr.rel (%p181) target = $region36
        $region35: #{tpu_custom_call.1} parent=31 // pred_region
          %p184 = scmp.lt.s32.totalorder %s14, 1
          %s185 = scalar_select %p184, %s14, 1
          %s186 = smul.addr %s185, 8
          %s187 = scalar_lea.vmem %s0, %s186
        $region36: #{tpu_custom_call.1} parent=31 // pred_fallthru
          _
      $region32: #{tpu_custom_call.1} parent=5 // pred_fallthru
        _
      %p188 = scmp.le.s32.totalorder 1, %s14
      %p189 = scmp.lt.s32.totalorder %s14, 3
      %p190 = pnand %p188, %p189
      %p191 = pneg %p190
      // Predicated region
      $region37: #{tpu_custom_call.1} parent=5 // pred_check
        _
      $region38: #{tpu_custom_call.1} parent=5 // pred_check_branch
        %193 = sbr.rel (%p190) target = $region40
      $region39: #{tpu_custom_call.1} parent=5 // pred_region
        %s194 = ssub.s32 %s14, 1
        %p195 = scmp.lt.s32.totalorder %s19, 1
        %s196 = scalar_select %p195, %s19, 1
        %s197 = smul.addr %s196, 8
        %s198 = scalar_lea.vmem %s0, %s197
        %p199 = pneg %p40
        %p200 = pneg %p37
        %p201 = pneg %p61
        %p202 = pneg %p58
        %p203 = pneg %p82
        %p204 = pneg %p79
        %p205 = pneg %p103
        %p206 = pneg %p100
        %p207 = pneg %p124
        %p208 = pneg %p121
        %p209 = pneg %p150
        %p210 = pneg %p147
        %s211 = sand.u32 %s137, 1
        %s212 = scalar_lea.sflag [#allocation3], %s211
        %s213 = sand.u32 %s137, 1
        %s214 = smul.addr %s213, 8
        %s215 = scalar_lea.vmem [#allocation2], %s214
        %p216 = scmp.lt.s32.totalorder %s19, 1
        %s217 = scalar_select %p216, %s19, 1
        %s218 = smul.addr %s217, 8
        %s219 = scalar_lea.vmem %s0, %s218
        %v220 = vld [vmem:[%s219] sm:$0xff]
        %v221 = vld [vmem:[%s1] sm:$0xff]
        %v222 = vld [vmem:[%s1 + $0x8] sm:$0xff]
        %v223 = vld [vmem:[%s1 + $0x10] sm:$0xff]
        %v224 = vld [vmem:[%s1 + $0x18] sm:$0xff]
        %v225 = vld [vmem:[%s2] sm:$0x1]
        %v227 = vlaneseq
        %v228 = vshrl.u32 %v227, 7
        %v229 = vsub.s32 0, %v228
        %v230 = vrot.slane %v225, %v229
        %vm232 = vcmask 261120
        %v234 = vsel %vm232, %v220, 0
        %236 = vmatprep.subr.mxu0 0.0
        %237 = vmatpush1.msra.mxu0 0.0
        %238 = vmatprep.subr.mxu0 0.0
        %239 = vmatpush1.msra.mxu0 0.0
        %240 = vmatprep.subr.mxu0 0.0
        %241 = vmatpush1.msra.mxu0 0.0
        %242 = vmatprep.subr.mxu0 0.0
        %243 = vmatpush1.msra.mxu0 0.0
        %244 = vmatprep.subr.mxu0 0.0
        %245 = vmatpush1.msra.mxu0 0.0
        %246 = vmatprep.subr.mxu0 0.0
        %247 = vmatpush1.msra.mxu0 0.0
        %248 = vmatprep.subr.mxu0 0.0
        %249 = vmatpush1.msra.mxu0 0.0
        %250 = vmatprep.subr.mxu0 0.0
        %251 = vmatpush1.msra.mxu0 0.0
        %252 = vmatprep.subr.mxu0 0.0
        %253 = vmatpush1.msra.mxu0 0.0
        %254 = vmatprep.subr.mxu0 0.0
        %255 = vmatpush1.msra.mxu0 0.0
        %256 = vmatprep.subr.mxu0 0.0
        %257 = vmatpush1.msra.mxu0 0.0
        %258 = vmatprep.subr.mxu0 0.0
        %259 = vmatpush1.msra.mxu0 0.0
        %260 = vmatprep.subr.mxu0 0.0
        %261 = vmatpush1.msra.mxu0 %v224
        %262 = vmatprep.subr.mxu0 0.0
        %263 = vmatpush1.msra.mxu0 %v223
        %264 = vmatprep.subr.mxu0 0.0
        %265 = vmatpush1.msra.mxu0 %v222
        %266 = vmatprep.subr.mxu0 0.0
        %267 = vmatpush1.msra.mxu0 %v221
        %268 = vmatprep.subr.mxu0 0.0
        %269 = vmatpush2.msra.mxu0 0.0
        %270 = vmatprep.subr.mxu0 0.0
        %271 = vmatpush2.msra.mxu0 0.0
        %272 = vmatprep.subr.mxu0 0.0
        %273 = vmatpush2.msra.mxu0 0.0
        %274 = vmatprep.subr.mxu0 0.0
        %275 = vmatpush2.msra.mxu0 0.0
        %276 = vmatprep.subr.mxu0 0.0
        %277 = vmatpush2.msra.mxu0 0.0
        %278 = vmatprep.subr.mxu0 0.0
        %279 = vmatpush2.msra.mxu0 0.0
        %280 = vmatprep.subr.mxu0 0.0
        %281 = vmatpush2.msra.mxu0 0.0
        %282 = vmatprep.subr.mxu0 0.0
        %283 = vmatpush2.msra.mxu0 0.0
        %284 = vmatprep.subr.mxu0 0.0
        %285 = vmatpush2.msra.mxu0 0.0
        %286 = vmatprep.subr.mxu0 0.0
        %287 = vmatpush2.msra.mxu0 0.0
        %288 = vmatprep.subr.mxu0 0.0
        %289 = vmatpush2.msra.mxu0 0.0
        %290 = vmatprep.subr.mxu0 0.0
        %291 = vmatpush2.msra.mxu0 0.0
        %292 = vmatprep.subr.mxu0 0.0
        %293 = vmatpush2.msra.mxu0 0.0
        %294 = vmatprep.subr.mxu0 0.0
        %295 = vmatpush2.msra.mxu0 0.0
        %296 = vmatprep.subr.mxu0 0.0
        %297 = vmatpush2.msra.mxu0 0.0
        %298 = vmatprep.subr.mxu0 0.0
        %299 = vmatpush2.msra.mxu0 0.0
        %300 = vmatprep.mubr.f32.mxu0 0.0
        %301 = vmatmul.mubr.f32.gmra.mxu0 %v234
        %v302 = vpop.f32.mrf.mxu0
        %v303 = vadd.f32 %v230, %v302
        %v304 = vpop.f32.mrf.mxu0
        %305 = vdwg.mxu0
        %v306 = vmax.f32 %v303, 0.0
        %v307 = vld [vmem:[%s3] sm:$0xff]
        %v308 = vld [vmem:[%s3 + $0x8] sm:$0xff]
        %v309 = vld [vmem:[%s4] sm:$0x1]
        %v311 = vlaneseq
        %v312 = vshrl.u32 %v311, 7
        %v313 = vsub.s32 0, %v312
        %v314 = vrot.slane %v309, %v313
        %vm316 = vcmask 130048
        %v318 = vsel %vm316, %v306, 0
        %320 = vmatprep.subr.mxu0 0.0
        %321 = vmatpush1.msra.mxu0 0.0
        %322 = vmatprep.subr.mxu0 0.0
        %323 = vmatpush1.msra.mxu0 0.0
        %324 = vmatprep.subr.mxu0 0.0
        %325 = vmatpush1.msra.mxu0 0.0
        %326 = vmatprep.subr.mxu0 0.0
        %327 = vmatpush1.msra.mxu0 0.0
        %328 = vmatprep.subr.mxu0 0.0
        %329 = vmatpush1.msra.mxu0 0.0
        %330 = vmatprep.subr.mxu0 0.0
        %331 = vmatpush1.msra.mxu0 0.0
        %332 = vmatprep.subr.mxu0 0.0
        %333 = vmatpush1.msra.mxu0 0.0
        %334 = vmatprep.subr.mxu0 0.0
        %335 = vmatpush1.msra.mxu0 0.0
        %336 = vmatprep.subr.mxu0 0.0
        %337 = vmatpush1.msra.mxu0 0.0
        %338 = vmatprep.subr.mxu0 0.0
        %339 = vmatpush1.msra.mxu0 0.0
        %340 = vmatprep.subr.mxu0 0.0
        %341 = vmatpush1.msra.mxu0 0.0
        %342 = vmatprep.subr.mxu0 0.0
        %343 = vmatpush1.msra.mxu0 0.0
        %344 = vmatprep.subr.mxu0 0.0
        %345 = vmatpush1.msra.mxu0 0.0
        %346 = vmatprep.subr.mxu0 0.0
        %347 = vmatpush1.msra.mxu0 0.0
        %348 = vmatprep.subr.mxu0 0.0
        %349 = vmatpush1.msra.mxu0 %v308
        %350 = vmatprep.subr.mxu0 0.0
        %351 = vmatpush1.msra.mxu0 %v307
        %352 = vmatprep.subr.mxu0 0.0
        %353 = vmatpush2.msra.mxu0 0.0
        %354 = vmatprep.subr.mxu0 0.0
        %355 = vmatpush2.msra.mxu0 0.0
        %356 = vmatprep.subr.mxu0 0.0
        %357 = vmatpush2.msra.mxu0 0.0
        %358 = vmatprep.subr.mxu0 0.0
        %359 = vmatpush2.msra.mxu0 0.0
        %360 = vmatprep.subr.mxu0 0.0
        %361 = vmatpush2.msra.mxu0 0.0
        %362 = vmatprep.subr.mxu0 0.0
        %363 = vmatpush2.msra.mxu0 0.0
        %364 = vmatprep.subr.mxu0 0.0
        %365 = vmatpush2.msra.mxu0 0.0
        %366 = vmatprep.subr.mxu0 0.0
        %367 = vmatpush2.msra.mxu0 0.0
        %368 = vmatprep.subr.mxu0 0.0
        %369 = vmatpush2.msra.mxu0 0.0
        %370 = vmatprep.subr.mxu0 0.0
        %371 = vmatpush2.msra.mxu0 0.0
        %372 = vmatprep.subr.mxu0 0.0
        %373 = vmatpush2.msra.mxu0 0.0
        %374 = vmatprep.subr.mxu0 0.0
        %375 = vmatpush2.msra.mxu0 0.0
        %376 = vmatprep.subr.mxu0 0.0
        %377 = vmatpush2.msra.mxu0 0.0
        %378 = vmatprep.subr.mxu0 0.0
        %379 = vmatpush2.msra.mxu0 0.0
        %380 = vmatprep.subr.mxu0 0.0
        %381 = vmatpush2.msra.mxu0 0.0
        %382 = vmatprep.subr.mxu0 0.0
        %383 = vmatpush2.msra.mxu0 0.0
        %384 = vmatprep.mubr.f32.mxu0 0.0
        %385 = vmatmul.mubr.f32.gmra.mxu0 %v318
        %v386 = vpop.f32.mrf.mxu0
        %v387 = vadd.f32 %v314, %v386
        %v388 = vpop.f32.mrf.mxu0
        %389 = vdwg.mxu0
        %v390 = vadd.f32 %v387, %v220
        %391 = vst.msk [vmem:[%s215] sm:$0xff] %vm232, %v390
        %s392 = sand.u32 %s137, 1
        %s393 = scalar_lea.sflag [#allocation3], %s392
        %s394 = sand.u32 %s137, 1
        %s395 = smul.addr %s394, 8
        %s396 = scalar_lea.vmem [#allocation2], %s395
        // Predicated region
        $region41: #{tpu_custom_call.1} parent=39 // pred_check
          %p397 = pneg %p147
        $region42: #{tpu_custom_call.1} parent=39 // pred_check_branch
          %399 = sbr.rel (%p397) target = $region44
        $region43: #{tpu_custom_call.1} parent=39 // pred_region
          %s401 = ssub.s32 128, 128
          %402 = vsyncadd %s393, %s401
          %s403 = smul.addr %s19, 128
          %s404 = scalar_lea.hbm %s5, %s403
          %s406 = sshll.u32 %s396, 4
          %s407 = int_to_ptr.vmem [resolvable:$true] %s406
          %409 = dma.vmem_to_hbm [thread:$0]  %s407, 128, %s404, %s393
        $region44: #{tpu_custom_call.1} parent=39 // pred_fallthru
          _
      $region40: #{tpu_custom_call.1} parent=5 // pred_fallthru
        _
      %p410 = scmp.le.s32.totalorder 2, %s14
      // Predicated region
      $region45: #{tpu_custom_call.1} parent=5 // pred_check
        %p411 = pneg %p410
      $region46: #{tpu_custom_call.1} parent=5 // pred_check_branch
        %413 = sbr.rel (%p411) target = $region48
      $region47: #{tpu_custom_call.1} parent=5 // pred_region
        %s414 = ssub.s32 %s14, 2
        // Predicated region
        $region49: #{tpu_custom_call.1} parent=47 // pred_check
          %p415 = pneg %p153
        $region50: #{tpu_custom_call.1} parent=47 // pred_check_branch
          %417 = sbr.rel (%p415) target = $region52
        $region51: #{tpu_custom_call.1} parent=47 // pred_region
          %s418 = sand.u32 %s138, 1
          %s419 = scalar_lea.sflag [#allocation3], %s418
          %s420 = sand.u32 %s138, 1
          %s421 = smul.addr %s420, 8
          %s422 = scalar_lea.vmem [#allocation2], %s421
          %423 = dma.done %s419, 128
        $region52: #{tpu_custom_call.1} parent=47 // pred_fallthru
          _
      $region48: #{tpu_custom_call.1} parent=5 // pred_fallthru
        _
    $region6: #{tpu_custom_call.1} parent=1 // loop_footer
      %s18 = sadd.s32 1, %s14
    $region7: #{tpu_custom_call.1} parent=1 // loop_footer_branch
      %13 = sbr.rel target = $region3
    $region8: #{tpu_custom_call.1} parent=1 // loop_exit
      _
    %424 = vsyncpa [#allocation3], 1
    %s425 = scalar_lea.sflag [#allocation3], 1
    %426 = vsyncpa %s425, 1

</llo_original>
